<compile_context>
chip_gen: v6e
topology: v6e:2x2x1
jax: 0.10.0
libtpu: 0.0.40
codegen_flags: <defaults>
</compile_context>

<pallas_src>
import functools

import jax
import jax.numpy as jnp
from jax.experimental import pallas as pl
from jax.experimental.pallas import tpu as pltpu


# ----------------------------------------------------------------------------
# Fused forward kernel
# ----------------------------------------------------------------------------
def _vae_forward_kernel(
    x_ref,            # (B, D_in)        fp32
    ew1_ref, eb1_ref,  # (D_in, H) bf16 , (1, H) fp32
    ew2_ref, eb2_ref,  # (H, 2Z)   bf16 , (1, 2Z) fp32   columns = [mu | logvar]
    dw1_ref, db1_ref,  # (Z, H)    bf16 , (1, H) fp32
    dw2_ref, db2_ref,  # (H, D_in) bf16 , (1, D_in) fp32
    eps_ref,           # (B, Z)    fp32
    mu_ref, logvar_ref, z_ref, logits_ref,   # outputs, fp32
    *, d_latent,
):
    # ---- encoder ----
    x = x_ref[...]
    h = jnp.dot(x.astype(jnp.bfloat16), ew1_ref[...],
                preferred_element_type=jnp.float32) + eb1_ref[...]
    h = jnp.maximum(h, 0.0)
    dist = jnp.dot(h.astype(jnp.bfloat16), ew2_ref[...],
                   preferred_element_type=jnp.float32) + eb2_ref[...]

    # ---- bottleneck: split [mu | logvar] at the lane boundary, reparam ----
    mu = dist[:, :d_latent]
    logvar = dist[:, d_latent:]
    std = jnp.exp(0.5 * logvar)          # EUP
    z = mu + std * eps_ref[...]          # VPU, fp32

    # ---- reconstructor ----
    h2 = jnp.dot(z.astype(jnp.bfloat16), dw1_ref[...],
                 preferred_element_type=jnp.float32) + db1_ref[...]
    h2 = jnp.maximum(h2, 0.0)
    logits = jnp.dot(h2.astype(jnp.bfloat16), dw2_ref[...],
                     preferred_element_type=jnp.float32) + db2_ref[...]

    # ---- outputs ----
    mu_ref[...] = mu
    logvar_ref[...] = logvar
    z_ref[...] = z
    logits_ref[...] = logits


# ----------------------------------------------------------------------------
# Wrapper
# ----------------------------------------------------------------------------
def vae_charly_forward(params, x_nchw, eps, d_latent):
    B = x_nchw.shape[0]
    x = x_nchw.reshape(B, -1).astype(jnp.float32)   # flatten NCHW -> (B, C*H*W)
    d_in = x.shape[1]
    d_hidden = params["enc_w1"].shape[1]

    vmem = pl.BlockSpec(memory_space=pltpu.MemorySpace.VMEM)

    mu, logvar, z, logits = pl.pallas_call(
        functools.partial(_vae_forward_kernel, d_latent=d_latent),
        out_shape=(
            jax.ShapeDtypeStruct((B, d_latent), jnp.float32),   # mu
            jax.ShapeDtypeStruct((B, d_latent), jnp.float32),   # logvar
            jax.ShapeDtypeStruct((B, d_latent), jnp.float32),   # z
            jax.ShapeDtypeStruct((B, d_in), jnp.float32),       # logits
        ),
        in_specs=[vmem] * 10,
        out_specs=(vmem, vmem, vmem, vmem),
    )(
        x,
        params["enc_w1"], params["enc_b1"],
        params["enc_w2"], params["enc_b2"],
        params["dec_w1"], params["dec_b1"],
        params["dec_w2"], params["dec_b2"],
        eps,
    )
    return {"z": z, "mu": mu, "logvar": logvar, "logits": logits}


# ----------------------------------------------------------------------------
# Parameter initialization (kaiming_uniform_init from the PyTorch module:
# kaiming_uniform weights, zero biases — deterministic via PRNGKey).
# Weights stored bf16 (MXU input), biases fp32 as (1, N) rows.
# ----------------------------------------------------------------------------
def kaiming_uniform(key, fan_in, fan_out):
    # torch.nn.init.kaiming_uniform_ default: a=0, fan_in mode, gain=sqrt(2)
    # => bound = sqrt(6 / fan_in)
    bound = (6.0 / fan_in) ** 0.5
    w = jax.random.uniform(key, (fan_in, fan_out), jnp.float32,
                           minval=-bound, maxval=bound)
    return w.astype(jnp.bfloat16)


def init_params(key, d_in, d_hidden, d_latent):
    ks = jax.random.split(key, 4)
    return {
        # encoder: Linear(d_in, d_hidden) + ReLU + Linear(d_hidden, 2*latent)
        "enc_w1": kaiming_uniform(ks[0], d_in, d_hidden),
        "enc_b1": jnp.zeros((1, d_hidden), jnp.float32),
        "enc_w2": kaiming_uniform(ks[1], d_hidden, 2 * d_latent),
        "enc_b2": jnp.zeros((1, 2 * d_latent), jnp.float32),
        # reconstructor: Linear(latent, d_hidden) + ReLU + Linear(d_hidden, d_in)
        "dec_w1": kaiming_uniform(ks[2], d_latent, d_hidden),
        "dec_b1": jnp.zeros((1, d_hidden), jnp.float32),
        "dec_w2": kaiming_uniform(ks[3], d_hidden, d_in),
        "dec_b2": jnp.zeros((1, d_in), jnp.float32),
    }


if __name__ == "__main__":
    B, C, H, W = 8, 1, 16, 16            # batch['sound'].unsqueeze(1) -> 1 channel
    D_IN = C * H * W                      # 256
    D_HIDDEN = 128
    D_LATENT = 128

    key = jax.random.PRNGKey(0)
    k_x, k_eps, k_p = jax.random.split(key, 3)

    params = init_params(k_p, D_IN, D_HIDDEN, D_LATENT)
    x = jax.random.normal(k_x, (B, C, H, W), jnp.float32)
    eps = jax.random.normal(k_eps, (B, D_LATENT), jnp.float32)

    out = vae_charly_forward(params, x, eps, D_LATENT)
    jax.block_until_ready(out)

    assert out["logits"].shape == (B, D_IN)
    assert out["z"].shape == (B, D_LATENT)
    assert out["mu"].shape == (B, D_LATENT)
    assert out["logvar"].shape == (B, D_LATENT)
    for v in out.values():
        assert bool(jnp.all(jnp.isfinite(v)))
    print("KERNEL_OK")
</pallas_src>

<mosaic_0001>
module attributes {stable_mosaic.version = 11 : i64} {
  func.func @_vae_forward_kernel(%arg0: memref<8x256xf32, #tpu.memory_space<vmem>>, %arg1: memref<256x128xbf16, #tpu.memory_space<vmem>>, %arg2: memref<1x128xf32, #tpu.memory_space<vmem>>, %arg3: memref<128x256xbf16, #tpu.memory_space<vmem>>, %arg4: memref<1x256xf32, #tpu.memory_space<vmem>>, %arg5: memref<128x128xbf16, #tpu.memory_space<vmem>>, %arg6: memref<1x128xf32, #tpu.memory_space<vmem>>, %arg7: memref<128x256xbf16, #tpu.memory_space<vmem>>, %arg8: memref<1x256xf32, #tpu.memory_space<vmem>>, %arg9: memref<8x128xf32, #tpu.memory_space<vmem>>, %arg10: memref<8x128xf32, #tpu.memory_space<vmem>>, %arg11: memref<8x128xf32, #tpu.memory_space<vmem>>, %arg12: memref<8x128xf32, #tpu.memory_space<vmem>>, %arg13: memref<8x256xf32, #tpu.memory_space<vmem>>) attributes {dimension_semantics = [], scalar_prefetch = 0 : i64, scratch_operands = 0 : i64, tpu.core_type = #tpu.core_type<tc>} {
    %c0 = arith.constant 0 : index
    %c0_0 = arith.constant 0 : index
    %0 = vector.load %arg0[%c0, %c0_0] : memref<8x256xf32, #tpu.memory_space<vmem>>, vector<8x256xf32>
    %1 = arith.truncf %0 : vector<8x256xf32> to vector<8x256xbf16>
    %c0_1 = arith.constant 0 : index
    %c0_2 = arith.constant 0 : index
    %2 = vector.load %arg1[%c0_1, %c0_2] : memref<256x128xbf16, #tpu.memory_space<vmem>>, vector<256x128xbf16>
    %cst = arith.constant dense<0.000000e+00> : vector<8x128xf32>
    %3 = tpu.matmul %1, %2, %cst {dimension_numbers = #tpu.dot_dimension_numbers<[1], [0], [0], [1], [0, 0, 1, 1], [], []>} : vector<8x256xbf16>, vector<256x128xbf16>, vector<8x128xf32> -> vector<8x128xf32>
    %c0_3 = arith.constant 0 : index
    %c0_4 = arith.constant 0 : index
    %4 = vector.load %arg2[%c0_3, %c0_4] : memref<1x128xf32, #tpu.memory_space<vmem>>, vector<1x128xf32>
    %5 = vector.broadcast %4 : vector<1x128xf32> to vector<8x128xf32>
    %6 = arith.addf %3, %5 : vector<8x128xf32>
    %cst_5 = arith.constant 0.000000e+00 : f32
    %7 = vector.broadcast %cst_5 : f32 to vector<8x128xf32>
    %8 = arith.maximumf %6, %7 : vector<8x128xf32>
    %9 = arith.truncf %8 : vector<8x128xf32> to vector<8x128xbf16>
    %c0_6 = arith.constant 0 : index
    %c0_7 = arith.constant 0 : index
    %10 = vector.load %arg3[%c0_6, %c0_7] : memref<128x256xbf16, #tpu.memory_space<vmem>>, vector<128x256xbf16>
    %cst_8 = arith.constant dense<0.000000e+00> : vector<8x256xf32>
    %11 = tpu.matmul %9, %10, %cst_8 {dimension_numbers = #tpu.dot_dimension_numbers<[1], [0], [0], [1], [0, 0, 1, 1], [], []>} : vector<8x128xbf16>, vector<128x256xbf16>, vector<8x256xf32> -> vector<8x256xf32>
    %c0_9 = arith.constant 0 : index
    %c0_10 = arith.constant 0 : index
    %12 = vector.load %arg4[%c0_9, %c0_10] : memref<1x256xf32, #tpu.memory_space<vmem>>, vector<1x256xf32>
    %13 = vector.broadcast %12 : vector<1x256xf32> to vector<8x256xf32>
    %14 = arith.addf %11, %13 : vector<8x256xf32>
    %15 = vector.extract_strided_slice %14 {offsets = [0, 0], sizes = [8, 128], strides = [1, 1]} : vector<8x256xf32> to vector<8x128xf32>
    %16 = vector.extract_strided_slice %14 {offsets = [0, 128], sizes = [8, 128], strides = [1, 1]} : vector<8x256xf32> to vector<8x128xf32>
    %cst_11 = arith.constant 5.000000e-01 : f32
    %17 = vector.broadcast %cst_11 : f32 to vector<8x128xf32>
    %18 = arith.mulf %17, %16 : vector<8x128xf32>
    %19 = math.exp %18 : vector<8x128xf32>
    %c0_12 = arith.constant 0 : index
    %c0_13 = arith.constant 0 : index
    %20 = vector.load %arg9[%c0_12, %c0_13] : memref<8x128xf32, #tpu.memory_space<vmem>>, vector<8x128xf32>
    %21 = arith.mulf %19, %20 : vector<8x128xf32>
    %22 = arith.addf %15, %21 : vector<8x128xf32>
    %23 = arith.truncf %22 : vector<8x128xf32> to vector<8x128xbf16>
    %c0_14 = arith.constant 0 : index
    %c0_15 = arith.constant 0 : index
    %24 = vector.load %arg5[%c0_14, %c0_15] : memref<128x128xbf16, #tpu.memory_space<vmem>>, vector<128x128xbf16>
    %cst_16 = arith.constant dense<0.000000e+00> : vector<8x128xf32>
    %25 = tpu.matmul %23, %24, %cst_16 {dimension_numbers = #tpu.dot_dimension_numbers<[1], [0], [0], [1], [0, 0, 1, 1], [], []>} : vector<8x128xbf16>, vector<128x128xbf16>, vector<8x128xf32> -> vector<8x128xf32>
    %c0_17 = arith.constant 0 : index
    %c0_18 = arith.constant 0 : index
    %26 = vector.load %arg6[%c0_17, %c0_18] : memref<1x128xf32, #tpu.memory_space<vmem>>, vector<1x128xf32>
    %27 = vector.broadcast %26 : vector<1x128xf32> to vector<8x128xf32>
    %28 = arith.addf %25, %27 : vector<8x128xf32>
    %cst_19 = arith.constant 0.000000e+00 : f32
    %29 = vector.broadcast %cst_19 : f32 to vector<8x128xf32>
    %30 = arith.maximumf %28, %29 : vector<8x128xf32>
    %31 = arith.truncf %30 : vector<8x128xf32> to vector<8x128xbf16>
    %c0_20 = arith.constant 0 : index
    %c0_21 = arith.constant 0 : index
    %32 = vector.load %arg7[%c0_20, %c0_21] : memref<128x256xbf16, #tpu.memory_space<vmem>>, vector<128x256xbf16>
    %cst_22 = arith.constant dense<0.000000e+00> : vector<8x256xf32>
    %33 = tpu.matmul %31, %32, %cst_22 {dimension_numbers = #tpu.dot_dimension_numbers<[1], [0], [0], [1], [0, 0, 1, 1], [], []>} : vector<8x128xbf16>, vector<128x256xbf16>, vector<8x256xf32> -> vector<8x256xf32>
    %c0_23 = arith.constant 0 : index
    %c0_24 = arith.constant 0 : index
    %34 = vector.load %arg8[%c0_23, %c0_24] : memref<1x256xf32, #tpu.memory_space<vmem>>, vector<1x256xf32>
    %35 = vector.broadcast %34 : vector<1x256xf32> to vector<8x256xf32>
    %36 = arith.addf %33, %35 : vector<8x256xf32>
    %c0_25 = arith.constant 0 : index
    %c0_26 = arith.constant 0 : index
    %37 = vector.load %arg10[%c0_25, %c0_26] : memref<8x128xf32, #tpu.memory_space<vmem>>, vector<8x128xf32>
    tpu.vector_store %arg10[%c0_25, %c0_26], %15 {strides = array<i32>} : memref<8x128xf32, #tpu.memory_space<vmem>>, vector<8x128xf32>,
    %c0_27 = arith.constant 0 : index
    %c0_28 = arith.constant 0 : index
    %38 = vector.load %arg11[%c0_27, %c0_28] : memref<8x128xf32, #tpu.memory_space<vmem>>, vector<8x128xf32>
    tpu.vector_store %arg11[%c0_27, %c0_28], %16 {strides = array<i32>} : memref<8x128xf32, #tpu.memory_space<vmem>>, vector<8x128xf32>,
    %c0_29 = arith.constant 0 : index
    %c0_30 = arith.constant 0 : index
    %39 = vector.load %arg12[%c0_29, %c0_30] : memref<8x128xf32, #tpu.memory_space<vmem>>, vector<8x128xf32>
    tpu.vector_store %arg12[%c0_29, %c0_30], %22 {strides = array<i32>} : memref<8x128xf32, #tpu.memory_space<vmem>>, vector<8x128xf32>,
    %c0_31 = arith.constant 0 : index
    %c0_32 = arith.constant 0 : index
    %40 = vector.load %arg13[%c0_31, %c0_32] : memref<8x256xf32, #tpu.memory_space<vmem>>, vector<8x256xf32>
    tpu.vector_store %arg13[%c0_31, %c0_32], %36 {strides = array<i32>} : memref<8x256xf32, #tpu.memory_space<vmem>>, vector<8x256xf32>,
    return
  }
}

</mosaic_0001>

<llo_original>
// kernel: tpu_custom_call.1
$region0: #{tpu_custom_call.1}
  #allocation0 [shape = 'u32[]', space=smem, size = 0x4, offset = 0x4, fixed_abs, tag = 'smem constant byte address 0x4 - core index']
  #allocation1 [shape = 'u32[144,128]{1,0:T(1,128)}', space=vmem, size = 0x12000, scoped, tag = 'internal scratch']
  %s0 = inlined_call_operand.hbm [shape: f32[8,256], index: 0, kind: input, shape index: {}]
  %s1 = inlined_call_operand.hbm [shape: bf16[256,128], index: 1, kind: input, shape index: {}]
  %s2 = inlined_call_operand.vmem [shape: f32[1,128], index: 2, kind: input, shape index: {}]
  %s3 = inlined_call_operand.hbm [shape: bf16[128,256], index: 3, kind: input, shape index: {}]
  %s4 = inlined_call_operand.vmem [shape: f32[1,256], index: 4, kind: input, shape index: {}]
  %s5 = inlined_call_operand.hbm [shape: bf16[128,128], index: 5, kind: input, shape index: {}]
  %s6 = inlined_call_operand.vmem [shape: f32[1,128], index: 6, kind: input, shape index: {}]
  %s7 = inlined_call_operand.hbm [shape: bf16[128,256], index: 7, kind: input, shape index: {}]
  %s8 = inlined_call_operand.vmem [shape: f32[1,256], index: 8, kind: input, shape index: {}]
  %s9 = inlined_call_operand.vmem [shape: f32[8,128], index: 9, kind: input, shape index: {}]
  %s10 = inlined_call_operand.hbm [shape: f32[8,128], index: 10, kind: output, shape index: {0}]
  %s11 = inlined_call_operand.hbm [shape: f32[8,128], index: 11, kind: output, shape index: {1}]
  %s12 = inlined_call_operand.hbm [shape: f32[8,128], index: 12, kind: output, shape index: {2}]
  %s13 = inlined_call_operand.hbm [shape: f32[8,256], index: 13, kind: output, shape index: {3}]
  %14 = xla_tuple %s10, %s11, %s12, %s13
  %s15 = sld [smem:[#allocation0]]
  $region94: #{tpu_custom_call.1} parent=0
    _
  %s17 = ssub.s32 1, %s15
  %s18 = scalar_select 0, %s17, %s15
  $region1: #{tpu_custom_call.1} parent=0
    #allocation2 [shape = 'u8[8192]{0}', space=vmem, size = 0x2000, scoped, tag = 'input window, operand 0, single buffered']
    #allocation3 [shape = 's32[1]{0}', space=sflag, size = 0x4, scoped, tag = 'scoped memory for tpu_custom_call.1']
    #allocation4 [shape = 's32[1]{0}', space=sflag, size = 0x4, scoped, tag = 'scoped memory for tpu_custom_call.1']
    #allocation5 [shape = 'u8[65536]{0}', space=vmem, size = 0x10000, scoped, tag = 'input window, operand 1, single buffered']
    #allocation6 [shape = 's32[1]{0}', space=sflag, size = 0x4, scoped, tag = 'scoped memory for tpu_custom_call.1']
    #allocation7 [shape = 'u8[65536]{0}', space=vmem, size = 0x10000, scoped, tag = 'input window, operand 3, single buffered']
    #allocation8 [shape = 'u8[32768]{0}', space=vmem, size = 0x8000, scoped, tag = 'input window, operand 5, single buffered']
    #allocation9 [shape = 's32[1]{0}', space=sflag, size = 0x4, scoped, tag = 'scoped memory for tpu_custom_call.1']
    #allocation10 [shape = 'u8[65536]{0}', space=vmem, size = 0x10000, scoped, tag = 'input window, operand 7, single buffered']
    #allocation11 [shape = 'u8[4096]{0}', space=vmem, size = 0x1000, scoped, tag = 'output window, operand 0, single buffered']
    #allocation12 [shape = 'u8[4096]{0}', space=vmem, size = 0x1000, scoped, tag = 'output window, operand 1, single buffered']
    #allocation13 [shape = 's32[1]{0}', space=sflag, size = 0x4, scoped, tag = 'scoped memory for tpu_custom_call.1']
    #allocation14 [shape = 'u8[4096]{0}', space=vmem, size = 0x1000, scoped, tag = 'output window, operand 2, single buffered']
    #allocation15 [shape = 'u8[8192]{0}', space=vmem, size = 0x2000, scoped, tag = 'output window, operand 3, single buffered']
    #allocation16 [shape = 's32[1]{0}', space=sflag, size = 0x4, scoped, tag = 'scoped memory for tpu_custom_call.1']
    %19 = vsyncpa [#allocation3], 0
    %20 = vsyncpa [#allocation6], 0
    %21 = vsyncpa [#allocation9], 0
    %22 = vsyncpa [#allocation4], 0
    %23 = vsyncpa [#allocation13], 0
    %24 = vsyncpa [#allocation16], 0
    // Predicated region
    $region2: #{tpu_custom_call.1} parent=1 // pred_check
      _
    $region3: #{tpu_custom_call.1} parent=1 // pred_check_branch
      %26 = sbr.rel (0) target = $region5
    $region4: #{tpu_custom_call.1} parent=1 // pred_region
      %s28 = ssub.s32 256, 256
      %29 = vsyncadd [#allocation3], %s28
      %s31 = sshll.u32 [#allocation2], 4
      %s32 = int_to_ptr.vmem [resolvable:$true] %s31
      %34 = dma.hbm_to_vmem [thread:$0]  %s0, 256, %s32, [#allocation3]
    $region5: #{tpu_custom_call.1} parent=1 // pred_fallthru
      _
    // Predicated region
    $region6: #{tpu_custom_call.1} parent=1 // pred_check
      _
    $region7: #{tpu_custom_call.1} parent=1 // pred_check_branch
      %36 = sbr.rel (0) target = $region9
    $region8: #{tpu_custom_call.1} parent=1 // pred_region
      %s38 = ssub.s32 2048, 2048
      %39 = vsyncadd [#allocation6], %s38
      %s40 = sshll.u32 [#allocation5], 4
      %s41 = int_to_ptr.vmem [resolvable:$true] %s40
      %46 = dma.hbm_to_vmem [thread:$0]  %s1, 2048, %s41, [#allocation6], 64, 64, 4
    $region9: #{tpu_custom_call.1} parent=1 // pred_fallthru
      _
    // Predicated region
    $region10: #{tpu_custom_call.1} parent=1 // pred_check
      _
    $region11: #{tpu_custom_call.1} parent=1 // pred_check_branch
      %48 = sbr.rel (0) target = $region13
    $region12: #{tpu_custom_call.1} parent=1 // pred_region
      _
    $region13: #{tpu_custom_call.1} parent=1 // pred_fallthru
      _
    // Predicated region
    $region14: #{tpu_custom_call.1} parent=1 // pred_check
      _
    $region15: #{tpu_custom_call.1} parent=1 // pred_check_branch
      %50 = sbr.rel (0) target = $region17
    $region16: #{tpu_custom_call.1} parent=1 // pred_region
      %s52 = ssub.s32 2048, 2048
      %53 = vsyncadd [#allocation6], %s52
      %s54 = sshll.u32 [#allocation7], 4
      %s55 = int_to_ptr.vmem [resolvable:$true] %s54
      %60 = dma.hbm_to_vmem [thread:$0]  %s3, 2048, %s55, [#allocation6], 128, 128, 8
    $region17: #{tpu_custom_call.1} parent=1 // pred_fallthru
      _
    // Predicated region
    $region18: #{tpu_custom_call.1} parent=1 // pred_check
      _
    $region19: #{tpu_custom_call.1} parent=1 // pred_check_branch
      %62 = sbr.rel (0) target = $region21
    $region20: #{tpu_custom_call.1} parent=1 // pred_region
      _
    $region21: #{tpu_custom_call.1} parent=1 // pred_fallthru
      _
    // Predicated region
    $region22: #{tpu_custom_call.1} parent=1 // pred_check
      _
    $region23: #{tpu_custom_call.1} parent=1 // pred_check_branch
      %64 = sbr.rel (0) target = $region25
    $region24: #{tpu_custom_call.1} parent=1 // pred_region
      %s66 = ssub.s32 1024, 1024
      %67 = vsyncadd [#allocation9], %s66
      %s68 = sshll.u32 [#allocation8], 4
      %s69 = int_to_ptr.vmem [resolvable:$true] %s68
      %74 = dma.hbm_to_vmem [thread:$0]  %s5, 1024, %s69, [#allocation9], 64, 64, 4
    $region25: #{tpu_custom_call.1} parent=1 // pred_fallthru
      _
    // Predicated region
    $region26: #{tpu_custom_call.1} parent=1 // pred_check
      _
    $region27: #{tpu_custom_call.1} parent=1 // pred_check_branch
      %76 = sbr.rel (0) target = $region29
    $region28: #{tpu_custom_call.1} parent=1 // pred_region
      _
    $region29: #{tpu_custom_call.1} parent=1 // pred_fallthru
      _
    // Predicated region
    $region30: #{tpu_custom_call.1} parent=1 // pred_check
      _
    $region31: #{tpu_custom_call.1} parent=1 // pred_check_branch
      %78 = sbr.rel (0) target = $region33
    $region32: #{tpu_custom_call.1} parent=1 // pred_region
      %s80 = ssub.s32 2048, 2048
      %81 = vsyncadd [#allocation9], %s80
      %s82 = sshll.u32 [#allocation10], 4
      %s83 = int_to_ptr.vmem [resolvable:$true] %s82
      %88 = dma.hbm_to_vmem [thread:$0]  %s7, 2048, %s83, [#allocation9], 128, 128, 8
    $region33: #{tpu_custom_call.1} parent=1 // pred_fallthru
      _
    // Predicated region
    $region34: #{tpu_custom_call.1} parent=1 // pred_check
      _
    $region35: #{tpu_custom_call.1} parent=1 // pred_check_branch
      %90 = sbr.rel (0) target = $region37
    $region36: #{tpu_custom_call.1} parent=1 // pred_region
      _
    $region37: #{tpu_custom_call.1} parent=1 // pred_fallthru
      _
    // Predicated region
    $region38: #{tpu_custom_call.1} parent=1 // pred_check
      _
    $region39: #{tpu_custom_call.1} parent=1 // pred_check_branch
      %92 = sbr.rel (0) target = $region41
    $region40: #{tpu_custom_call.1} parent=1 // pred_region
      _
    $region41: #{tpu_custom_call.1} parent=1 // pred_fallthru
      _
    // Predicated region
    $region42: #{tpu_custom_call.1} parent=1 // pred_check
      _
    $region43: #{tpu_custom_call.1} parent=1 // pred_check_branch
      %94 = sbr.rel (0) target = $region45
    $region44: #{tpu_custom_call.1} parent=1 // pred_region
      %95 = dma.done [#allocation3], 256
    $region45: #{tpu_custom_call.1} parent=1 // pred_fallthru
      _
    // Predicated region
    $region46: #{tpu_custom_call.1} parent=1 // pred_check
      _
    $region47: #{tpu_custom_call.1} parent=1 // pred_check_branch
      %97 = sbr.rel (0) target = $region49
    $region48: #{tpu_custom_call.1} parent=1 // pred_region
      %98 = dma.done [#allocation6], 2048
    $region49: #{tpu_custom_call.1} parent=1 // pred_fallthru
      _
    // Predicated region
    $region50: #{tpu_custom_call.1} parent=1 // pred_check
      _
    $region51: #{tpu_custom_call.1} parent=1 // pred_check_branch
      %100 = sbr.rel (0) target = $region53
    $region52: #{tpu_custom_call.1} parent=1 // pred_region
      %101 = dma.done [#allocation6], 2048
    $region53: #{tpu_custom_call.1} parent=1 // pred_fallthru
      _
    // Predicated region
    $region54: #{tpu_custom_call.1} parent=1 // pred_check
      _
    $region55: #{tpu_custom_call.1} parent=1 // pred_check_branch
      %103 = sbr.rel (0) target = $region57
    $region56: #{tpu_custom_call.1} parent=1 // pred_region
      %104 = dma.done [#allocation9], 1024
    $region57: #{tpu_custom_call.1} parent=1 // pred_fallthru
      _
    // Predicated region
    $region58: #{tpu_custom_call.1} parent=1 // pred_check
      _
    $region59: #{tpu_custom_call.1} parent=1 // pred_check_branch
      %106 = sbr.rel (0) target = $region61
    $region60: #{tpu_custom_call.1} parent=1 // pred_region
      %107 = dma.done [#allocation9], 2048
    $region61: #{tpu_custom_call.1} parent=1 // pred_fallthru
      _
    %v109 = vld [vmem:[#allocation2] sm:$0xff]
    %v110 = vld [vmem:[#allocation2 + $0x8] sm:$0xff]
    %v111 = vpack.c.bf16 %v109, %v109
    %v112 = vpack.c.bf16 %v110, %v110
    %v113 = vld [vmem:[#allocation5] sm:$0xf]
    %v114 = vld [vmem:[#allocation5 + $0x4] sm:$0xf]
    %v115 = vld [vmem:[#allocation5 + $0x8] sm:$0xf]
    %v116 = vld [vmem:[#allocation5 + $0xc] sm:$0xf]
    %v117 = vld [vmem:[#allocation5 + $0x10] sm:$0xf]
    %v118 = vld [vmem:[#allocation5 + $0x14] sm:$0xf]
    %v119 = vld [vmem:[#allocation5 + $0x18] sm:$0xf]
    %v120 = vld [vmem:[#allocation5 + $0x1c] sm:$0xf]
    %v121 = vld [vmem:[#allocation5 + $0x20] sm:$0xf]
    %v122 = vld [vmem:[#allocation5 + $0x24] sm:$0xf]
    %v123 = vld [vmem:[#allocation5 + $0x28] sm:$0xf]
    %v124 = vld [vmem:[#allocation5 + $0x2c] sm:$0xf]
    %v125 = vld [vmem:[#allocation5 + $0x30] sm:$0xf]
    %v126 = vld [vmem:[#allocation5 + $0x34] sm:$0xf]
    %v127 = vld [vmem:[#allocation5 + $0x38] sm:$0xf]
    %v128 = vld [vmem:[#allocation5 + $0x3c] sm:$0xf]
    %v129 = vld [vmem:[#allocation5 + $0x40] sm:$0xf]
    %v130 = vld [vmem:[#allocation5 + $0x44] sm:$0xf]
    %v131 = vld [vmem:[#allocation5 + $0x48] sm:$0xf]
    %v132 = vld [vmem:[#allocation5 + $0x4c] sm:$0xf]
    %v133 = vld [vmem:[#allocation5 + $0x50] sm:$0xf]
    %v134 = vld [vmem:[#allocation5 + $0x54] sm:$0xf]
    %v135 = vld [vmem:[#allocation5 + $0x58] sm:$0xf]
    %v136 = vld [vmem:[#allocation5 + $0x5c] sm:$0xf]
    %v137 = vld [vmem:[#allocation5 + $0x60] sm:$0xf]
    %v138 = vld [vmem:[#allocation5 + $0x64] sm:$0xf]
    %v139 = vld [vmem:[#allocation5 + $0x68] sm:$0xf]
    %v140 = vld [vmem:[#allocation5 + $0x6c] sm:$0xf]
    %v141 = vld [vmem:[#allocation5 + $0x70] sm:$0xf]
    %v142 = vld [vmem:[#allocation5 + $0x74] sm:$0xf]
    %v143 = vld [vmem:[#allocation5 + $0x78] sm:$0xf]
    %v144 = vld [vmem:[#allocation5 + $0x7c] sm:$0xf]
    %v145 = vld [vmem:[%s2] sm:$0x1]
    %v147 = vlaneseq
    %v148 = vshrl.u32 %v147, 7
    %v149 = vsub.s32 0, %v148
    %v150 = vrot.slane %v145, %v149
    %v184 = vunpack.c.l.b16 %v113
    %v185 = vunpack.c.l.b16 %v114
    %v186 = vunpack.c.l.b16 %v115
    %v187 = vunpack.c.l.b16 %v116
    %v188 = vunpack.c.l.b16 %v117
    %v189 = vunpack.c.l.b16 %v118
    %v190 = vunpack.c.l.b16 %v119
    %v191 = vunpack.c.l.b16 %v120
    %v192 = vunpack.c.l.b16 %v121
    %v193 = vunpack.c.l.b16 %v122
    %v194 = vunpack.c.l.b16 %v123
    %v195 = vunpack.c.l.b16 %v124
    %v196 = vunpack.c.l.b16 %v125
    %v197 = vunpack.c.l.b16 %v126
    %v198 = vunpack.c.l.b16 %v127
    %v199 = vunpack.c.l.b16 %v128
    %v200 = vunpack.c.l.b16 %v129
    %v201 = vunpack.c.l.b16 %v130
    %v202 = vunpack.c.l.b16 %v131
    %v203 = vunpack.c.l.b16 %v132
    %v204 = vunpack.c.l.b16 %v133
    %v205 = vunpack.c.l.b16 %v134
    %v206 = vunpack.c.l.b16 %v135
    %v207 = vunpack.c.l.b16 %v136
    %v208 = vunpack.c.l.b16 %v137
    %v209 = vunpack.c.l.b16 %v138
    %v210 = vunpack.c.l.b16 %v139
    %v211 = vunpack.c.l.b16 %v140
    %v212 = vunpack.c.l.b16 %v141
    %v213 = vunpack.c.l.b16 %v142
    %v214 = vunpack.c.l.b16 %v143
    %v215 = vunpack.c.l.b16 %v144
    %v216 = vpack.c.b16 %v185, %v184
    %v217 = vpack.c.b16 %v187, %v186
    %v218 = vpack.c.b16 %v189, %v188
    %v219 = vpack.c.b16 %v191, %v190
    %v220 = vpack.c.b16 %v193, %v192
    %v221 = vpack.c.b16 %v195, %v194
    %v222 = vpack.c.b16 %v197, %v196
    %v223 = vpack.c.b16 %v199, %v198
    %v224 = vpack.c.b16 %v201, %v200
    %v225 = vpack.c.b16 %v203, %v202
    %v226 = vpack.c.b16 %v205, %v204
    %v227 = vpack.c.b16 %v207, %v206
    %v228 = vpack.c.b16 %v209, %v208
    %v229 = vpack.c.b16 %v211, %v210
    %v230 = vpack.c.b16 %v213, %v212
    %v231 = vpack.c.b16 %v215, %v214
    %248 = vmatprep.subr.bf16.mxu0 0
    %249 = vmatpush1.bf16.msra.mxu0 %v223
    %250 = vmatprep.subr.bf16.mxu0 0
    %251 = vmatpush1.bf16.msra.mxu0 %v222
    %252 = vmatprep.subr.bf16.mxu0 0
    %253 = vmatpush1.bf16.msra.mxu0 %v221
    %254 = vmatprep.subr.bf16.mxu0 0
    %255 = vmatpush1.bf16.msra.mxu0 %v220
    %256 = vmatprep.subr.bf16.mxu0 0
    %257 = vmatpush1.bf16.msra.mxu0 %v219
    %258 = vmatprep.subr.bf16.mxu0 0
    %259 = vmatpush1.bf16.msra.mxu0 %v218
    %260 = vmatprep.subr.bf16.mxu0 0
    %261 = vmatpush1.bf16.msra.mxu0 %v217
    %262 = vmatprep.subr.bf16.mxu0 0
    %263 = vmatpush1.bf16.msra.mxu0 %v216
    %264 = vmatprep.subr.bf16.mxu0 0
    %265 = vmatpush2.bf16.msra.mxu0 %v231
    %266 = vmatprep.subr.bf16.mxu0 0
    %267 = vmatpush2.bf16.msra.mxu0 %v230
    %268 = vmatprep.subr.bf16.mxu0 0
    %269 = vmatpush2.bf16.msra.mxu0 %v229
    %270 = vmatprep.subr.bf16.mxu0 0
    %271 = vmatpush2.bf16.msra.mxu0 %v228
    %272 = vmatprep.subr.bf16.mxu0 0
    %273 = vmatpush2.bf16.msra.mxu0 %v227
    %274 = vmatprep.subr.bf16.mxu0 0
    %275 = vmatpush2.bf16.msra.mxu0 %v226
    %276 = vmatprep.subr.bf16.mxu0 0
    %277 = vmatpush2.bf16.msra.mxu0 %v225
    %278 = vmatprep.subr.bf16.mxu0 0
    %279 = vmatpush2.bf16.msra.mxu0 %v224
    %280 = vmatprep.mubr.bf16.mxu0 %v112
    %281 = vmatmul.mubr.bf16.gmra.mxu0 %v111
    %v282 = vpop.f32.mrf.mxu0
    %v283 = vadd.f32 %v150, %v282
    %v284 = vpop.f32.mrf.mxu0
    %v285 = vpop.f32.mrf.mxu0
    %v286 = vpop.f32.mrf.mxu0
    %287 = vdwg.mxu0
    %v288 = vmax.f32 %v283, 0.0
    %v289 = vpack.c.bf16 %v288, %v288
    %v290 = vld [vmem:[#allocation7] sm:$0xff]
    %v291 = vld [vmem:[#allocation7 + $0x8] sm:$0xff]
    %v292 = vld [vmem:[#allocation7 + $0x10] sm:$0xff]
    %v293 = vld [vmem:[#allocation7 + $0x18] sm:$0xff]
    %v294 = vld [vmem:[#allocation7 + $0x20] sm:$0xff]
    %v295 = vld [vmem:[#allocation7 + $0x28] sm:$0xff]
    %v296 = vld [vmem:[#allocation7 + $0x30] sm:$0xff]
    %v297 = vld [vmem:[#allocation7 + $0x38] sm:$0xff]
    %v298 = vld [vmem:[#allocation7 + $0x40] sm:$0xff]
    %v299 = vld [vmem:[#allocation7 + $0x48] sm:$0xff]
    %v300 = vld [vmem:[#allocation7 + $0x50] sm:$0xff]
    %v301 = vld [vmem:[#allocation7 + $0x58] sm:$0xff]
    %v302 = vld [vmem:[#allocation7 + $0x60] sm:$0xff]
    %v303 = vld [vmem:[#allocation7 + $0x68] sm:$0xff]
    %v304 = vld [vmem:[#allocation7 + $0x70] sm:$0xff]
    %v305 = vld [vmem:[#allocation7 + $0x78] sm:$0xff]
    %v306 = vld [vmem:[%s4] sm:$0x3]
    %v308 = vlaneseq
    %v309 = vshrl.u32 %v308, 7
    %v310 = vsub.s32 0, %v309
    %v311 = vrot.slane %v306, %v310
    %v312 = vlaneseq
    %v313 = vshrl.u32 %v312, 7
    %v314 = vsub.s32 1, %v313
    %v315 = vrot.slane %v306, %v314
    %v334 = vunpack.c.l.b16 %v290
    %v335 = vunpack.c.h.b16 %v290
    %v336 = vunpack.c.l.b16 %v291
    %v337 = vunpack.c.h.b16 %v291
    %v338 = vunpack.c.l.b16 %v292
    %v339 = vunpack.c.h.b16 %v292
    %v340 = vunpack.c.l.b16 %v293
    %v341 = vunpack.c.h.b16 %v293
    %v342 = vunpack.c.l.b16 %v294
    %v343 = vunpack.c.h.b16 %v294
    %v344 = vunpack.c.l.b16 %v295
    %v345 = vunpack.c.h.b16 %v295
    %v346 = vunpack.c.l.b16 %v296
    %v347 = vunpack.c.h.b16 %v296
    %v348 = vunpack.c.l.b16 %v297
    %v349 = vunpack.c.h.b16 %v297
    %v350 = vunpack.c.l.b16 %v298
    %v351 = vunpack.c.h.b16 %v298
    %v352 = vunpack.c.l.b16 %v299
    %v353 = vunpack.c.h.b16 %v299
    %v354 = vunpack.c.l.b16 %v300
    %v355 = vunpack.c.h.b16 %v300
    %v356 = vunpack.c.l.b16 %v301
    %v357 = vunpack.c.h.b16 %v301
    %v358 = vunpack.c.l.b16 %v302
    %v359 = vunpack.c.h.b16 %v302
    %v360 = vunpack.c.l.b16 %v303
    %v361 = vunpack.c.h.b16 %v303
    %v362 = vunpack.c.l.b16 %v304
    %v363 = vunpack.c.h.b16 %v304
    %v364 = vunpack.c.l.b16 %v305
    %v365 = vunpack.c.h.b16 %v305
    %v366 = vpack.c.b16 %v336, %v334
    %v367 = vpack.c.b16 %v337, %v335
    %v368 = vpack.c.b16 %v340, %v338
    %v369 = vpack.c.b16 %v341, %v339
    %v370 = vpack.c.b16 %v344, %v342
    %v371 = vpack.c.b16 %v345, %v343
    %v372 = vpack.c.b16 %v348, %v346
    %v373 = vpack.c.b16 %v349, %v347
    %v374 = vpack.c.b16 %v352, %v350
    %v375 = vpack.c.b16 %v353, %v351
    %v376 = vpack.c.b16 %v356, %v354
    %v377 = vpack.c.b16 %v357, %v355
    %v378 = vpack.c.b16 %v360, %v358
    %v379 = vpack.c.b16 %v361, %v359
    %v380 = vpack.c.b16 %v364, %v362
    %v381 = vpack.c.b16 %v365, %v363
    %398 = vmatprep.subr.bf16.mxu0 %v381
    %399 = vmatpush1.bf16.msra.mxu0 %v380
    %400 = vmatprep.subr.bf16.mxu0 %v379
    %401 = vmatpush1.bf16.msra.mxu0 %v378
    %402 = vmatprep.subr.bf16.mxu0 %v377
    %403 = vmatpush1.bf16.msra.mxu0 %v376
    %404 = vmatprep.subr.bf16.mxu0 %v375
    %405 = vmatpush1.bf16.msra.mxu0 %v374
    %406 = vmatprep.subr.bf16.mxu0 %v373
    %407 = vmatpush1.bf16.msra.mxu0 %v372
    %408 = vmatprep.subr.bf16.mxu0 %v371
    %409 = vmatpush1.bf16.msra.mxu0 %v370
    %410 = vmatprep.subr.bf16.mxu0 %v369
    %411 = vmatpush1.bf16.msra.mxu0 %v368
    %412 = vmatprep.subr.bf16.mxu0 %v367
    %413 = vmatpush1.bf16.msra.mxu0 %v366
    %414 = vmatprep.subr.bf16.mxu0 0
    %415 = vmatpush2.bf16.msra.mxu0 0
    %416 = vmatprep.subr.bf16.mxu0 0
    %417 = vmatpush2.bf16.msra.mxu0 0
    %418 = vmatprep.subr.bf16.mxu0 0
    %419 = vmatpush2.bf16.msra.mxu0 0
    %420 = vmatprep.subr.bf16.mxu0 0
    %421 = vmatpush2.bf16.msra.mxu0 0
    %422 = vmatprep.subr.bf16.mxu0 0
    %423 = vmatpush2.bf16.msra.mxu0 0
    %424 = vmatprep.subr.bf16.mxu0 0
    %425 = vmatpush2.bf16.msra.mxu0 0
    %426 = vmatprep.subr.bf16.mxu0 0
    %427 = vmatpush2.bf16.msra.mxu0 0
    %428 = vmatprep.subr.bf16.mxu0 0
    %429 = vmatpush2.bf16.msra.mxu0 0
    %430 = vmatprep.mubr.bf16.mxu0 0
    %431 = vmatmul.mubr.bf16.gmra.mxu0 %v289
    %v432 = vpop.f32.mrf.mxu0
    %v433 = vadd.f32 %v311, %v432
    %v434 = vpop.f32.mrf.mxu0
    %v435 = vadd.f32 %v315, %v434
    %v436 = vpop.f32.mrf.mxu0
    %v437 = vpop.f32.mrf.mxu0
    %438 = vdwg.mxu0
    %v439 = vmul.f32 %v435, 0.5
    %v440 = vmul.f32 %v439, 1.442695
    %v441 = vpow.pop %v440
    %v442 = vld [vmem:[%s9] sm:$0xff]
    %v443 = vmul.f32 %v441, %v442
    %v444 = vadd.f32 %v433, %v443
    %v445 = vpack.c.bf16 %v444, %v444
    %v446 = vld [vmem:[#allocation8] sm:$0xf]
    %v447 = vld [vmem:[#allocation8 + $0x4] sm:$0xf]
    %v448 = vld [vmem:[#allocation8 + $0x8] sm:$0xf]
    %v449 = vld [vmem:[#allocation8 + $0xc] sm:$0xf]
    %v450 = vld [vmem:[#allocation8 + $0x10] sm:$0xf]
    %v451 = vld [vmem:[#allocation8 + $0x14] sm:$0xf]
    %v452 = vld [vmem:[#allocation8 + $0x18] sm:$0xf]
    %v453 = vld [vmem:[#allocation8 + $0x1c] sm:$0xf]
    %v454 = vld [vmem:[#allocation8 + $0x20] sm:$0xf]
    %v455 = vld [vmem:[#allocation8 + $0x24] sm:$0xf]
    %v456 = vld [vmem:[#allocation8 + $0x28] sm:$0xf]
    %v457 = vld [vmem:[#allocation8 + $0x2c] sm:$0xf]
    %v458 = vld [vmem:[#allocation8 + $0x30] sm:$0xf]
    %v459 = vld [vmem:[#allocation8 + $0x34] sm:$0xf]
    %v460 = vld [vmem:[#allocation8 + $0x38] sm:$0xf]
    %v461 = vld [vmem:[#allocation8 + $0x3c] sm:$0xf]
    %v462 = vld [vmem:[%s6] sm:$0x1]
    %v464 = vlaneseq
    %v465 = vshrl.u32 %v464, 7
    %v466 = vsub.s32 0, %v465
    %v467 = vrot.slane %v462, %v466
    %v485 = vunpack.c.l.b16 %v446
    %v486 = vunpack.c.l.b16 %v447
    %v487 = vunpack.c.l.b16 %v448
    %v488 = vunpack.c.l.b16 %v449
    %v489 = vunpack.c.l.b16 %v450
    %v490 = vunpack.c.l.b16 %v451
    %v491 = vunpack.c.l.b16 %v452
    %v492 = vunpack.c.l.b16 %v453
    %v493 = vunpack.c.l.b16 %v454
    %v494 = vunpack.c.l.b16 %v455
    %v495 = vunpack.c.l.b16 %v456
    %v496 = vunpack.c.l.b16 %v457
    %v497 = vunpack.c.l.b16 %v458
    %v498 = vunpack.c.l.b16 %v459
    %v499 = vunpack.c.l.b16 %v460
    %v500 = vunpack.c.l.b16 %v461
    %v501 = vpack.c.b16 %v486, %v485
    %v502 = vpack.c.b16 %v488, %v487
    %v503 = vpack.c.b16 %v490, %v489
    %v504 = vpack.c.b16 %v492, %v491
    %v505 = vpack.c.b16 %v494, %v493
    %v506 = vpack.c.b16 %v496, %v495
    %v507 = vpack.c.b16 %v498, %v497
    %v508 = vpack.c.b16 %v500, %v499
    %517 = vmatprep.subr.bf16.mxu0 0
    %518 = vmatpush1.bf16.msra.mxu0 %v508
    %519 = vmatprep.subr.bf16.mxu0 0
    %520 = vmatpush1.bf16.msra.mxu0 %v507
    %521 = vmatprep.subr.bf16.mxu0 0
    %522 = vmatpush1.bf16.msra.mxu0 %v506
    %523 = vmatprep.subr.bf16.mxu0 0
    %524 = vmatpush1.bf16.msra.mxu0 %v505
    %525 = vmatprep.subr.bf16.mxu0 0
    %526 = vmatpush1.bf16.msra.mxu0 %v504
    %527 = vmatprep.subr.bf16.mxu0 0
    %528 = vmatpush1.bf16.msra.mxu0 %v503
    %529 = vmatprep.subr.bf16.mxu0 0
    %530 = vmatpush1.bf16.msra.mxu0 %v502
    %531 = vmatprep.subr.bf16.mxu0 0
    %532 = vmatpush1.bf16.msra.mxu0 %v501
    %533 = vmatprep.subr.bf16.mxu0 0
    %534 = vmatpush2.bf16.msra.mxu0 0
    %535 = vmatprep.subr.bf16.mxu0 0
    %536 = vmatpush2.bf16.msra.mxu0 0
    %537 = vmatprep.subr.bf16.mxu0 0
    %538 = vmatpush2.bf16.msra.mxu0 0
    %539 = vmatprep.subr.bf16.mxu0 0
    %540 = vmatpush2.bf16.msra.mxu0 0
    %541 = vmatprep.subr.bf16.mxu0 0
    %542 = vmatpush2.bf16.msra.mxu0 0
    %543 = vmatprep.subr.bf16.mxu0 0
    %544 = vmatpush2.bf16.msra.mxu0 0
    %545 = vmatprep.subr.bf16.mxu0 0
    %546 = vmatpush2.bf16.msra.mxu0 0
    %547 = vmatprep.subr.bf16.mxu0 0
    %548 = vmatpush2.bf16.msra.mxu0 0
    %549 = vmatprep.mubr.bf16.mxu0 0
    %550 = vmatmul.mubr.bf16.gmra.mxu0 %v445
    %v551 = vpop.f32.mrf.mxu0
    %v552 = vadd.f32 %v467, %v551
    %v553 = vpop.f32.mrf.mxu0
    %v554 = vpop.f32.mrf.mxu0
    %v555 = vpop.f32.mrf.mxu0
    %556 = vdwg.mxu0
    %v557 = vmax.f32 %v552, 0.0
    %v558 = vpack.c.bf16 %v557, %v557
    %v559 = vld [vmem:[#allocation10] sm:$0xff]
    %v560 = vld [vmem:[#allocation10 + $0x8] sm:$0xff]
    %v561 = vld [vmem:[#allocation10 + $0x10] sm:$0xff]
    %v562 = vld [vmem:[#allocation10 + $0x18] sm:$0xff]
    %v563 = vld [vmem:[#allocation10 + $0x20] sm:$0xff]
    %v564 = vld [vmem:[#allocation10 + $0x28] sm:$0xff]
    %v565 = vld [vmem:[#allocation10 + $0x30] sm:$0xff]
    %v566 = vld [vmem:[#allocation10 + $0x38] sm:$0xff]
    %v567 = vld [vmem:[#allocation10 + $0x40] sm:$0xff]
    %v568 = vld [vmem:[#allocation10 + $0x48] sm:$0xff]
    %v569 = vld [vmem:[#allocation10 + $0x50] sm:$0xff]
    %v570 = vld [vmem:[#allocation10 + $0x58] sm:$0xff]
    %v571 = vld [vmem:[#allocation10 + $0x60] sm:$0xff]
    %v572 = vld [vmem:[#allocation10 + $0x68] sm:$0xff]
    %v573 = vld [vmem:[#allocation10 + $0x70] sm:$0xff]
    %v574 = vld [vmem:[#allocation10 + $0x78] sm:$0xff]
    %v575 = vld [vmem:[%s8] sm:$0x3]
    %v577 = vlaneseq
    %v578 = vshrl.u32 %v577, 7
    %v579 = vsub.s32 0, %v578
    %v580 = vrot.slane %v575, %v579
    %v581 = vlaneseq
    %v582 = vshrl.u32 %v581, 7
    %v583 = vsub.s32 1, %v582
    %v584 = vrot.slane %v575, %v583
    %v603 = vunpack.c.l.b16 %v559
    %v604 = vunpack.c.h.b16 %v559
    %v605 = vunpack.c.l.b16 %v560
    %v606 = vunpack.c.h.b16 %v560
    %v607 = vunpack.c.l.b16 %v561
    %v608 = vunpack.c.h.b16 %v561
    %v609 = vunpack.c.l.b16 %v562
    %v610 = vunpack.c.h.b16 %v562
    %v611 = vunpack.c.l.b16 %v563
    %v612 = vunpack.c.h.b16 %v563
    %v613 = vunpack.c.l.b16 %v564
    %v614 = vunpack.c.h.b16 %v564
    %v615 = vunpack.c.l.b16 %v565
    %v616 = vunpack.c.h.b16 %v565
    %v617 = vunpack.c.l.b16 %v566
    %v618 = vunpack.c.h.b16 %v566
    %v619 = vunpack.c.l.b16 %v567
    %v620 = vunpack.c.h.b16 %v567
    %v621 = vunpack.c.l.b16 %v568
    %v622 = vunpack.c.h.b16 %v568
    %v623 = vunpack.c.l.b16 %v569
    %v624 = vunpack.c.h.b16 %v569
    %v625 = vunpack.c.l.b16 %v570
    %v626 = vunpack.c.h.b16 %v570
    %v627 = vunpack.c.l.b16 %v571
    %v628 = vunpack.c.h.b16 %v571
    %v629 = vunpack.c.l.b16 %v572
    %v630 = vunpack.c.h.b16 %v572
    %v631 = vunpack.c.l.b16 %v573
    %v632 = vunpack.c.h.b16 %v573
    %v633 = vunpack.c.l.b16 %v574
    %v634 = vunpack.c.h.b16 %v574
    %v635 = vpack.c.b16 %v605, %v603
    %v636 = vpack.c.b16 %v606, %v604
    %v637 = vpack.c.b16 %v609, %v607
    %v638 = vpack.c.b16 %v610, %v608
    %v639 = vpack.c.b16 %v613, %v611
    %v640 = vpack.c.b16 %v614, %v612
    %v641 = vpack.c.b16 %v617, %v615
    %v642 = vpack.c.b16 %v618, %v616
    %v643 = vpack.c.b16 %v621, %v619
    %v644 = vpack.c.b16 %v622, %v620
    %v645 = vpack.c.b16 %v625, %v623
    %v646 = vpack.c.b16 %v626, %v624
    %v647 = vpack.c.b16 %v629, %v627
    %v648 = vpack.c.b16 %v630, %v628
    %v649 = vpack.c.b16 %v633, %v631
    %v650 = vpack.c.b16 %v634, %v632
    %667 = vmatprep.subr.bf16.mxu0 %v650
    %668 = vmatpush1.bf16.msra.mxu0 %v649
    %669 = vmatprep.subr.bf16.mxu0 %v648
    %670 = vmatpush1.bf16.msra.mxu0 %v647
    %671 = vmatprep.subr.bf16.mxu0 %v646
    %672 = vmatpush1.bf16.msra.mxu0 %v645
    %673 = vmatprep.subr.bf16.mxu0 %v644
    %674 = vmatpush1.bf16.msra.mxu0 %v643
    %675 = vmatprep.subr.bf16.mxu0 %v642
    %676 = vmatpush1.bf16.msra.mxu0 %v641
    %677 = vmatprep.subr.bf16.mxu0 %v640
    %678 = vmatpush1.bf16.msra.mxu0 %v639
    %679 = vmatprep.subr.bf16.mxu0 %v638
    %680 = vmatpush1.bf16.msra.mxu0 %v637
    %681 = vmatprep.subr.bf16.mxu0 %v636
    %682 = vmatpush1.bf16.msra.mxu0 %v635
    %683 = vmatprep.subr.bf16.mxu0 0
    %684 = vmatpush2.bf16.msra.mxu0 0
    %685 = vmatprep.subr.bf16.mxu0 0
    %686 = vmatpush2.bf16.msra.mxu0 0
    %687 = vmatprep.subr.bf16.mxu0 0
    %688 = vmatpush2.bf16.msra.mxu0 0
    %689 = vmatprep.subr.bf16.mxu0 0
    %690 = vmatpush2.bf16.msra.mxu0 0
    %691 = vmatprep.subr.bf16.mxu0 0
    %692 = vmatpush2.bf16.msra.mxu0 0
    %693 = vmatprep.subr.bf16.mxu0 0
    %694 = vmatpush2.bf16.msra.mxu0 0
    %695 = vmatprep.subr.bf16.mxu0 0
    %696 = vmatpush2.bf16.msra.mxu0 0
    %697 = vmatprep.subr.bf16.mxu0 0
    %698 = vmatpush2.bf16.msra.mxu0 0
    %699 = vmatprep.mubr.bf16.mxu0 0
    %700 = vmatmul.mubr.bf16.gmra.mxu0 %v558
    %v701 = vpop.f32.mrf.mxu0
    %v702 = vadd.f32 %v580, %v701
    %v703 = vpop.f32.mrf.mxu0
    %v704 = vadd.f32 %v584, %v703
    %v705 = vpop.f32.mrf.mxu0
    %v706 = vpop.f32.mrf.mxu0
    %707 = vdwg.mxu0
    %708 = vst [vmem:[#allocation11] sm:$0xff] %v433
    %709 = vst [vmem:[#allocation12] sm:$0xff] %v435
    %710 = vst [vmem:[#allocation14] sm:$0xff] %v444
    %711 = vst [vmem:[#allocation15] sm:$0xff] %v702
    %712 = vst [vmem:[#allocation15 + $0x8] sm:$0xff] %v704
    // Predicated region
    $region62: #{tpu_custom_call.1} parent=1 // pred_check
      _
    $region63: #{tpu_custom_call.1} parent=1 // pred_check_branch
      %714 = sbr.rel (0) target = $region65
    $region64: #{tpu_custom_call.1} parent=1 // pred_region
      %s716 = ssub.s32 128, 128
      %717 = vsyncadd [#allocation4], %s716
      %s719 = sshll.u32 [#allocation11], 4
      %s720 = int_to_ptr.vmem [resolvable:$true] %s719
      %722 = dma.vmem_to_hbm [thread:$0]  %s720, 128, %s10, [#allocation4]
    $region65: #{tpu_custom_call.1} parent=1 // pred_fallthru
      _
    // Predicated region
    $region66: #{tpu_custom_call.1} parent=1 // pred_check
      _
    $region67: #{tpu_custom_call.1} parent=1 // pred_check_branch
      %724 = sbr.rel (0) target = $region69
    $region68: #{tpu_custom_call.1} parent=1 // pred_region
      %s726 = ssub.s32 128, 128
      %727 = vsyncadd [#allocation13], %s726
      %s729 = sshll.u32 [#allocation12], 4
      %s730 = int_to_ptr.vmem [resolvable:$true] %s729
      %732 = dma.vmem_to_hbm [thread:$0]  %s730, 128, %s11, [#allocation13]
    $region69: #{tpu_custom_call.1} parent=1 // pred_fallthru
      _
    // Predicated region
    $region70: #{tpu_custom_call.1} parent=1 // pred_check
      _
    $region71: #{tpu_custom_call.1} parent=1 // pred_check_branch
      %734 = sbr.rel (0) target = $region73
    $region72: #{tpu_custom_call.1} parent=1 // pred_region
      %s736 = ssub.s32 128, 128
      %737 = vsyncadd [#allocation13], %s736
      %s739 = sshll.u32 [#allocation14], 4
      %s740 = int_to_ptr.vmem [resolvable:$true] %s739
      %742 = dma.vmem_to_hbm [thread:$0]  %s740, 128, %s12, [#allocation13]
    $region73: #{tpu_custom_call.1} parent=1 // pred_fallthru
      _
    // Predicated region
    $region74: #{tpu_custom_call.1} parent=1 // pred_check
      _
    $region75: #{tpu_custom_call.1} parent=1 // pred_check_branch
      %744 = sbr.rel (0) target = $region77
    $region76: #{tpu_custom_call.1} parent=1 // pred_region
      %s746 = ssub.s32 256, 256
      %747 = vsyncadd [#allocation16], %s746
      %s749 = sshll.u32 [#allocation15], 4
      %s750 = int_to_ptr.vmem [resolvable:$true] %s749
      %752 = dma.vmem_to_hbm [thread:$0]  %s750, 256, %s13, [#allocation16]
    $region77: #{tpu_custom_call.1} parent=1 // pred_fallthru
      _
    // Predicated region
    $region78: #{tpu_custom_call.1} parent=1 // pred_check
      _
    $region79: #{tpu_custom_call.1} parent=1 // pred_check_branch
      %754 = sbr.rel (0) target = $region81
    $region80: #{tpu_custom_call.1} parent=1 // pred_region
      %755 = dma.done [#allocation4], 128
    $region81: #{tpu_custom_call.1} parent=1 // pred_fallthru
      _
    // Predicated region
    $region82: #{tpu_custom_call.1} parent=1 // pred_check
      _
    $region83: #{tpu_custom_call.1} parent=1 // pred_check_branch
      %757 = sbr.rel (0) target = $region85
    $region84: #{tpu_custom_call.1} parent=1 // pred_region
      %758 = dma.done [#allocation13], 128
    $region85: #{tpu_custom_call.1} parent=1 // pred_fallthru
      _
    // Predicated region
    $region86: #{tpu_custom_call.1} parent=1 // pred_check
      _
    $region87: #{tpu_custom_call.1} parent=1 // pred_check_branch
      %760 = sbr.rel (0) target = $region89
    $region88: #{tpu_custom_call.1} parent=1 // pred_region
      %761 = dma.done [#allocation13], 128
    $region89: #{tpu_custom_call.1} parent=1 // pred_fallthru
      _
    // Predicated region
    $region90: #{tpu_custom_call.1} parent=1 // pred_check
      _
    $region91: #{tpu_custom_call.1} parent=1 // pred_check_branch
      %763 = sbr.rel (0) target = $region93
    $region92: #{tpu_custom_call.1} parent=1 // pred_region
      %764 = dma.done [#allocation16], 256
    $region93: #{tpu_custom_call.1} parent=1 // pred_fallthru
      _
    %765 = vsyncpa [#allocation3], 1
    %766 = vsyncpa [#allocation6], 1
    %767 = vsyncpa [#allocation9], 1
    %768 = vsyncpa [#allocation4], 1
    %769 = vsyncpa [#allocation13], 1
    %770 = vsyncpa [#allocation16], 1

</llo_original>
